<compile_context>
chip_gen: v6e
topology: v6e:2x2x1
jax: 0.10.0
libtpu: 0.0.40
codegen_flags: <defaults>
</compile_context>

<pallas_src>
import functools

import jax
import jax.numpy as jnp
from jax.experimental import pallas as pl
from jax.experimental.pallas import tpu as pltpu


def _pointwise_conv_kernel(x_ref, w_ref, *rest, cin, use_vpu, has_bias):
    # x_ref: (Cin, thw), w_ref: (Cout, Cin), [b_ref: (Cout, 1)], o_ref: (Cout, thw)
    if has_bias:
        b_ref, o_ref = rest
    else:
        (o_ref,) = rest

    if use_vpu:
        # Cin-step VPU multiply-add chain (Cin is tiny, e.g. 3):
        #   acc += w[:, c] (column, bcast over lanes) * x[c, :] (row, bcast over sublanes)
        x = x_ref[...]
        w = w_ref[...]
        acc = w[:, 0:1].astype(jnp.float32) * x[0:1, :].astype(jnp.float32)
        for c in range(1, cin):
            acc = acc + (w[:, c:c + 1].astype(jnp.float32)
                         * x[c:c + 1, :].astype(jnp.float32))
    else:
        # MXU dot: (Cout, Cin) @ (Cin, thw) -> f32 accumulate.  Issues in the
        # vector-extended slot, keeping the VALU free; hidden under HBM time.
        acc = jnp.dot(w_ref[...], x_ref[...], preferred_element_type=jnp.float32)

    if has_bias:
        acc = acc + b_ref[...].astype(jnp.float32)  # (Cout,1) broadcast over lanes

    o_ref[...] = acc.astype(o_ref.dtype)


def _pick_tile(HW, B, thw_default):
    """Pick the lane tile: large, lane-dense, and with >= 2 total grid steps."""
    if HW < 128:
        thw = HW                                   # full-extent block (legal)
    elif HW <= thw_default:
        thw = (HW // 128) * 128                    # dense main tile + small ragged tail
    else:
        thw = thw_default                          # already a multiple of 128
    n_hw = pl.cdiv(HW, thw)

    # v7x megacore: make sure there are at least 2 grid steps to shard.
    if B * n_hw < 2 and HW >= 256:
        thw = pl.cdiv(pl.cdiv(HW, 2), 128) * 128
        n_hw = pl.cdiv(HW, thw)
    return thw, n_hw


def pointwise_conv2d(x, weight, bias=None, *, thw=8192):
    """x: (B, Cin, H, W), weight: (Cout, Cin, 1, 1), bias: (Cout,) or None
    -> (B, Cout, H, W)."""
    B, Cin, H, W = x.shape
    Cout = weight.shape[0]
    HW = H * W

    # Free reshapes: collapse contiguous trailing spatial dims; drop 1x1 taps.
    x_flat = x.reshape(B, Cin, HW)
    w_mat = weight.reshape(Cout, Cin)
    has_bias = bias is not None

    thw, n_hw = _pick_tile(HW, B, thw)

    # VPU only pays off for tiny Cin with f32 inputs (no f32 FMA on v6e, no
    # bf16 VPU on v5e); otherwise use the MXU dot.
    use_vpu = (Cin <= 3) and (x.dtype == jnp.float32) and (w_mat.dtype == jnp.float32)

    kernel = functools.partial(
        _pointwise_conv_kernel, cin=Cin, use_vpu=use_vpu, has_bias=has_bias)

    in_specs = [
        # batch dim squeezed out of the kernel view
        pl.BlockSpec((None, Cin, thw), lambda b, j: (b, 0, j)),
        # weight: constant block index -> fetched once, reused
        pl.BlockSpec((Cout, Cin), lambda b, j: (0, 0)),
    ]
    call_args = [x_flat, w_mat]
    if has_bias:
        in_specs.append(pl.BlockSpec((Cout, 1), lambda b, j: (0, 0)))
        call_args.append(bias.reshape(Cout, 1))

    itemsize = jnp.dtype(x.dtype).itemsize
    bytes_accessed = (B * Cin * HW + B * Cout * HW + Cout * Cin
                      + (Cout if has_bias else 0)) * itemsize
    cost = pl.CostEstimate(
        flops=2 * B * Cout * Cin * HW,
        transcendentals=0,
        bytes_accessed=bytes_accessed,
    )

    out_flat = pl.pallas_call(
        kernel,
        out_shape=jax.ShapeDtypeStruct((B, Cout, HW), x.dtype),
        grid_spec=pltpu.PrefetchScalarGridSpec(
            num_scalar_prefetch=0,
            grid=(B, n_hw),
            in_specs=in_specs,
            out_specs=pl.BlockSpec((None, Cout, thw), lambda b, j: (b, 0, j)),
        ),
        compiler_params=pltpu.CompilerParams(
            dimension_semantics=("parallel", "parallel"),
        ),
        cost_estimate=cost,
    )(*call_args)

    return out_flat.reshape(B, Cout, H, W)


if __name__ == "__main__":
    in_channels = 3
    out_channels = 64
    batch = 2
    H = W = 16

    key = jax.random.PRNGKey(0)
    kx, kw, kb = jax.random.split(key, 3)

    x = jax.random.normal(kx, (batch, in_channels, H, W), dtype=jnp.float32)

    # Deterministic Conv2d-style init: uniform(-b, b), b = 1/sqrt(fan_in),
    # fan_in = in_channels * 1 * 1.  bias=False per the module spec.
    bound = 1.0 / jnp.sqrt(jnp.float32(in_channels))
    weight = jax.random.uniform(
        kw, (out_channels, in_channels, 1, 1),
        minval=-bound, maxval=bound, dtype=jnp.float32,
    )

    # Main path: bias=False (matches the module spec).
    out = pointwise_conv2d(x, weight)
    out = jax.block_until_ready(out)

    w2d = weight.reshape(out_channels, in_channels)
    ref = jnp.einsum("bchw,oc->bohw", x, w2d)
    assert out.shape == (batch, out_channels, H, W), out.shape
    assert jnp.allclose(out, ref, atol=1e-5, rtol=1e-5), "mismatch vs reference"

    # Sanity-check the fused-bias path too (module supports bias=True).
    bias_vec = jax.random.uniform(
        kb, (out_channels,), minval=-bound, maxval=bound, dtype=jnp.float32)
    out_b = jax.block_until_ready(pointwise_conv2d(x, weight, bias_vec))
    ref_b = ref + bias_vec[None, :, None, None]
    assert jnp.allclose(out_b, ref_b, atol=1e-5, rtol=1e-5), "bias mismatch"

    print("KERNEL_OK")
</pallas_src>

<mosaic_0001>
module attributes {stable_mosaic.version = 11 : i64} {
  func.func @_pointwise_conv_kernel(%arg0: i32, %arg1: i32, %arg2: memref<1x3x256xf32, #tpu.memory_space<vmem>>, %arg3: memref<64x3xf32, #tpu.memory_space<vmem>>, %arg4: memref<1x64x256xf32, #tpu.memory_space<vmem>>) attributes {dimension_semantics = [#tpu.dimension_semantics<parallel>, #tpu.dimension_semantics<parallel>], iteration_bounds = array<i64: 2, 1>, scalar_prefetch = 0 : i64, scratch_operands = 0 : i64, tpu.core_type = #tpu.core_type<tc>, window_params = [{transform_indices = @transform_0, window_bounds = array<i64: 1, 3, 256>}, {pipeline_mode = #tpu.pipeline_mode<synchronous>, transform_indices = @transform_1, window_bounds = array<i64: 64, 3>}, {transform_indices = @transform_2, window_bounds = array<i64: 1, 64, 256>}]} {
    %c0 = arith.constant 0 : index
    %c0_0 = arith.constant 0 : index
    %c0_1 = arith.constant 0 : index
    %0 = vector.load %arg2[%c0, %c0_0, %c0_1] : memref<1x3x256xf32, #tpu.memory_space<vmem>>, vector<1x3x256xf32>
    %1 = vector.shape_cast %0 : vector<1x3x256xf32> to vector<3x256xf32>
    %c0_2 = arith.constant 0 : index
    %c0_3 = arith.constant 0 : index
    %2 = vector.load %arg3[%c0_2, %c0_3] : memref<64x3xf32, #tpu.memory_space<vmem>>, vector<64x3xf32>
    %3 = vector.extract_strided_slice %2 {offsets = [0, 0], sizes = [64, 1], strides = [1, 1]} : vector<64x3xf32> to vector<64x1xf32>
    %4 = vector.extract_strided_slice %1 {offsets = [0, 0], sizes = [1, 256], strides = [1, 1]} : vector<3x256xf32> to vector<1x256xf32>
    %5 = vector.broadcast %3 : vector<64x1xf32> to vector<64x256xf32>
    %6 = vector.broadcast %4 : vector<1x256xf32> to vector<64x256xf32>
    %7 = arith.mulf %5, %6 : vector<64x256xf32>
    %8 = vector.extract_strided_slice %2 {offsets = [0, 1], sizes = [64, 1], strides = [1, 1]} : vector<64x3xf32> to vector<64x1xf32>
    %9 = vector.extract_strided_slice %1 {offsets = [1, 0], sizes = [1, 256], strides = [1, 1]} : vector<3x256xf32> to vector<1x256xf32>
    %10 = vector.broadcast %8 : vector<64x1xf32> to vector<64x256xf32>
    %11 = vector.broadcast %9 : vector<1x256xf32> to vector<64x256xf32>
    %12 = arith.mulf %10, %11 : vector<64x256xf32>
    %13 = arith.addf %7, %12 : vector<64x256xf32>
    %14 = vector.extract_strided_slice %2 {offsets = [0, 2], sizes = [64, 1], strides = [1, 1]} : vector<64x3xf32> to vector<64x1xf32>
    %15 = vector.extract_strided_slice %1 {offsets = [2, 0], sizes = [1, 256], strides = [1, 1]} : vector<3x256xf32> to vector<1x256xf32>
    %16 = vector.broadcast %14 : vector<64x1xf32> to vector<64x256xf32>
    %17 = vector.broadcast %15 : vector<1x256xf32> to vector<64x256xf32>
    %18 = arith.mulf %16, %17 : vector<64x256xf32>
    %19 = arith.addf %13, %18 : vector<64x256xf32>
    %c0_4 = arith.constant 0 : index
    %c0_5 = arith.constant 0 : index
    %c0_6 = arith.constant 0 : index
    %20 = vector.load %arg4[%c0_4, %c0_5, %c0_6] : memref<1x64x256xf32, #tpu.memory_space<vmem>>, vector<1x64x256xf32>
    %21 = vector.shape_cast %20 : vector<1x64x256xf32> to vector<64x256xf32>
    %22 = vector.shape_cast %19 : vector<64x256xf32> to vector<1x64x256xf32>
    tpu.vector_store %arg4[%c0_4, %c0_5, %c0_6], %22 {strides = array<i32>} : memref<1x64x256xf32, #tpu.memory_space<vmem>>, vector<1x64x256xf32>,
    return
  }
  func.func @transform_0(%arg0: i32, %arg1: i32) -> (i32, i32, i32) {
    %c0_i32 = arith.constant 0 : i32
    %c0_i32_0 = arith.constant 0 : i32
    return %arg0, %c0_i32, %arg1 : i32, i32, i32
  }
  func.func @transform_1(%arg0: i32, %arg1: i32) -> (i32, i32) {
    %c0_i32 = arith.constant 0 : i32
    %c0_i32_0 = arith.constant 0 : i32
    %c0_i32_1 = arith.constant 0 : i32
    return %c0_i32, %c0_i32_0 : i32, i32
  }
  func.func @transform_2(%arg0: i32, %arg1: i32) -> (i32, i32, i32) {
    %c0_i32 = arith.constant 0 : i32
    %c0_i32_0 = arith.constant 0 : i32
    return %arg0, %c0_i32, %arg1 : i32, i32, i32
  }
}

</mosaic_0001>

<llo_original>
// kernel: tpu_custom_call.1
$region0: #{tpu_custom_call.1}
  #allocation0 [shape = 'u32[]', space=smem, size = 0x4, offset = 0x4, fixed_abs, tag = 'smem constant byte address 0x4 - core index']
  #allocation1 [shape = 'u32[144,128]{1,0:T(1,128)}', space=vmem, size = 0x12000, scoped, tag = 'internal scratch']
  %s0 = inlined_call_operand.vmem [shape: f32[2,3,256], index: 0, kind: input, shape index: {}]
  %s1 = inlined_call_operand.vmem [shape: f32[64,3], index: 1, kind: input, shape index: {}]
  %s2 = inlined_call_operand.hbm [shape: f32[2,64,256], index: 2, kind: output, shape index: {}]
  %s3 = sld [smem:[#allocation0]]
  $region41: #{tpu_custom_call.1} parent=0
    _
  %s5 = ssub.s32 1, %s3
  %s6 = scalar_select 0, %s5, %s3
  $region1: #{tpu_custom_call.1} parent=0
    #allocation2 [shape = 'u8[131072]{0}', space=vmem, size = 0x20000, scoped, tag = 'output window, operand 0']
    #allocation3 [shape = 's32[2]{0}', space=sflag, size = 0x8, scoped, tag = 'scoped memory for tpu_custom_call.1']
    %7 = vsyncpa [#allocation3], 0
    %s8 = scalar_lea.sflag [#allocation3], 1
    %9 = vsyncpa %s8, 0
    loop: start=0, step=1, limit=4
    $region2: #{tpu_custom_call.1} parent=1 // loop_pre_header
      _
    $region3: #{tpu_custom_call.1} parent=1 // loop_header
      %s11 = sphi 0, %s15
      %p12 = scmp.ge.s32.totalorder %s11, 4
      %s18 = sphi 0, %s30
      %s19 = sphi 0, %s26
      %s20 = sphi 0, %s18
      %s21 = sphi 0, %s19
      %s22 = sphi 0, %s20
      %s23 = sphi 0, %s21
      %s35 = sphi 0, %s37
      %s38 = sphi 0, %s35
      %s39 = sphi 0, %s38
      %s55 = sphi 0, %s39
      %s59 = sphi 0, %s59
      %s61 = sphi 0, %s59
      %s62 = sphi 0, %s61
      %s76 = sphi 0, %s62
      %s84 = sphi 0, %s86
      %s87 = sphi 0, %s84
      %s88 = sphi 0, %s87
      %s104 = sphi 0, %s88
    $region4: #{tpu_custom_call.1} parent=1 // loop_header_branch
      %14 = sbr.rel (%p12) target = $region8
    $region5: #{tpu_custom_call.1} parent=1 // loop_body
      %s16 = ssub.s32 %s11, 1
      %s17 = ssub.s32 %s11, 2
      %s24 = sadd.s32 1, %s19
      %p25 = scmp.ge.s32.totalorder %s24, 1
      %s26 = scalar_select %p25, 0, %s24
      %s27 = sadd.s32 1, %s18
      %s28 = scalar_select %p25, %s27, %s18
      %p29 = scmp.ge.s32.totalorder %s28, 2
      %s30 = scalar_select %p29, 0, %s28
      %s31 = ssub.s32 %s18, %s30
      %s32 = ssub.s32 %s19, %s26
      %s33 = sor.u32 %s31, %s32
      %p34 = scmp.eq.s32.totalorder %s33, 0
      %s36 = sadd.s32 %s35, 1
      %s37 = scalar_select %p34, %s35, %s36
      %p40 = pneg %p34
      %p41 = scmp.eq.s32.totalorder %s11, 1
      %p42 = por %p40, %p41
      %p43 = scmp.ne.s32.totalorder %s35, %s38
      %p44 = scmp.eq.s32.totalorder %s11, 0
      %p45 = por %p43, %p44
      %p46 = scmp.ne.s32.totalorder %s35, %s38
      %p47 = scmp.eq.s32.totalorder %s16, 1
      %p48 = por %p46, %p47
      %p49 = scmp.ne.s32.totalorder %s38, %s39
      %p50 = scmp.eq.s32.totalorder %s16, 0
      %p51 = por %p49, %p50
      %p52 = scmp.ne.s32.totalorder %s38, %s39
      %p53 = scmp.eq.s32.totalorder %s17, 1
      %p54 = por %p52, %p53
      %p56 = scmp.ne.s32.totalorder %s39, %s55
      %p57 = scmp.eq.s32.totalorder %s17, 0
      %p58 = por %p56, %p57
      %s60 = sadd.s32 %s59, 1
      %p63 = scmp.eq.s32.totalorder %s11, 1
      %p64 = scmp.ne.s32.totalorder %s59, %s61
      %p65 = scmp.eq.s32.totalorder %s11, 0
      %p66 = por %p64, %p65
      %p67 = scmp.ne.s32.totalorder %s59, %s61
      %p68 = scmp.eq.s32.totalorder %s16, 1
      %p69 = por %p67, %p68
      %p70 = scmp.ne.s32.totalorder %s61, %s62
      %p71 = scmp.eq.s32.totalorder %s16, 0
      %p72 = por %p70, %p71
      %p73 = scmp.ne.s32.totalorder %s61, %s62
      %p74 = scmp.eq.s32.totalorder %s17, 1
      %p75 = por %p73, %p74
      %p77 = scmp.ne.s32.totalorder %s62, %s76
      %p78 = scmp.eq.s32.totalorder %s17, 0
      %p79 = por %p77, %p78
      %s80 = ssub.s32 %s18, %s30
      %s81 = ssub.s32 %s19, %s26
      %s82 = sor.u32 %s80, %s81
      %p83 = scmp.eq.s32.totalorder %s82, 0
      %s85 = sadd.s32 %s84, 1
      %s86 = scalar_select %p83, %s84, %s85
      %p89 = pneg %p83
      %p90 = scmp.eq.s32.totalorder %s11, 1
      %p91 = por %p89, %p90
      %p92 = scmp.ne.s32.totalorder %s84, %s87
      %p93 = scmp.eq.s32.totalorder %s11, 0
      %p94 = por %p92, %p93
      %p95 = scmp.ne.s32.totalorder %s84, %s87
      %p96 = scmp.eq.s32.totalorder %s16, 1
      %p97 = por %p95, %p96
      %p98 = scmp.ne.s32.totalorder %s87, %s88
      %p99 = scmp.eq.s32.totalorder %s16, 0
      %p100 = por %p98, %p99
      %p101 = scmp.ne.s32.totalorder %s87, %s88
      %p102 = scmp.eq.s32.totalorder %s17, 1
      %p103 = por %p101, %p102
      %p105 = scmp.ne.s32.totalorder %s88, %s104
      %p106 = scmp.eq.s32.totalorder %s17, 0
      %p107 = por %p105, %p106
      %p108 = scmp.le.s32.totalorder 1, %s11
      %p109 = scmp.lt.s32.totalorder %s11, 3
      %p110 = pnand %p108, %p109
      %p111 = pneg %p110
      // Predicated region
      $region9: #{tpu_custom_call.1} parent=5 // pred_check
        _
      $region10: #{tpu_custom_call.1} parent=5 // pred_check_branch
        %113 = sbr.rel (%p110) target = $region12
      $region11: #{tpu_custom_call.1} parent=5 // pred_region
        %s114 = ssub.s32 %s11, 1
        // Predicated region
        $region13: #{tpu_custom_call.1} parent=11 // pred_check
          %p115 = pneg %p72
        $region14: #{tpu_custom_call.1} parent=11 // pred_check_branch
          %117 = sbr.rel (%p115) target = $region16
        $region15: #{tpu_custom_call.1} parent=11 // pred_region
          _
        $region16: #{tpu_custom_call.1} parent=11 // pred_fallthru
          _
      $region12: #{tpu_custom_call.1} parent=5 // pred_fallthru
        _
      %p118 = scmp.lt.s32.totalorder %s11, 2
      // Predicated region
      $region17: #{tpu_custom_call.1} parent=5 // pred_check
        %p119 = pneg %p118
      $region18: #{tpu_custom_call.1} parent=5 // pred_check_branch
        %121 = sbr.rel (%p119) target = $region20
      $region19: #{tpu_custom_call.1} parent=5 // pred_region
        // Predicated region
        $region21: #{tpu_custom_call.1} parent=19 // pred_check
          %p122 = pneg %p45
        $region22: #{tpu_custom_call.1} parent=19 // pred_check_branch
          %124 = sbr.rel (%p122) target = $region24
        $region23: #{tpu_custom_call.1} parent=19 // pred_region
          %s125 = smul.u32 2, %s19
          %p126 = scmp.lt.s32.totalorder %s18, 1
          %s127 = scalar_select %p126, %s18, 1
          %p128 = scmp.lt.s32.totalorder %s125, 1
          %s129 = scalar_select %p128, %s125, 1
          %s130 = smul.addr %s127, 2
          %s131 = sadd.s32 %s129, %s130
          %s132 = smul.addr %s131, 4
          %s133 = scalar_lea.vmem %s0, %s132
          %s134 = smul.u32 2, %s19
        $region24: #{tpu_custom_call.1} parent=19 // pred_fallthru
          _
      $region20: #{tpu_custom_call.1} parent=5 // pred_fallthru
        _
      %p135 = scmp.le.s32.totalorder 1, %s11
      %p136 = scmp.lt.s32.totalorder %s11, 3
      %p137 = pnand %p135, %p136
      %p138 = pneg %p137
      // Predicated region
      $region25: #{tpu_custom_call.1} parent=5 // pred_check
        _
      $region26: #{tpu_custom_call.1} parent=5 // pred_check_branch
        %140 = sbr.rel (%p137) target = $region28
      $region27: #{tpu_custom_call.1} parent=5 // pred_region
        %s141 = ssub.s32 %s11, 1
        %s142 = smul.u32 2, %s21
        %p143 = scmp.lt.s32.totalorder %s20, 1
        %s144 = scalar_select %p143, %s20, 1
        %p145 = scmp.lt.s32.totalorder %s142, 1
        %s146 = scalar_select %p145, %s142, 1
        %s147 = smul.addr %s144, 2
        %s148 = sadd.s32 %s146, %s147
        %s149 = smul.addr %s148, 4
        %s150 = scalar_lea.vmem %s0, %s149
        %p151 = pneg %p51
        %p152 = pneg %p48
        %p153 = pneg %p72
        %p154 = pneg %p69
        %p155 = pneg %p100
        %p156 = pneg %p97
        %s157 = sand.u32 %s87, 1
        %s158 = scalar_lea.sflag [#allocation3], %s157
        %s159 = sand.u32 %s87, 1
        %s160 = smul.addr %s159, 128
        %s161 = scalar_lea.vmem [#allocation2], %s160
        %s162 = smul.u32 2, %s21
        %p163 = scmp.lt.s32.totalorder %s20, 1
        %s164 = scalar_select %p163, %s20, 1
        %p165 = scmp.lt.s32.totalorder %s162, 1
        %s166 = scalar_select %p165, %s162, 1
        %s167 = smul.addr %s164, 2
        %s168 = sadd.s32 %s166, %s167
        %s169 = smul.addr %s168, 4
        %s170 = scalar_lea.vmem %s0, %s169
        %s171 = smul.u32 2, %s21
        %s172 = smul.u32 2, %s21
        %v173 = vld [vmem:[%s170] sm:$0x77]
        %v174 = vld [vmem:[%s1] sm:$0xff]
        %v175 = vld [vmem:[%s1 + $0x8] sm:$0xff]
        %v176 = vld [vmem:[%s1 + $0x10] sm:$0xff]
        %v177 = vld [vmem:[%s1 + $0x18] sm:$0xff]
        %v178 = vld [vmem:[%s1 + $0x20] sm:$0xff]
        %v179 = vld [vmem:[%s1 + $0x28] sm:$0xff]
        %v180 = vld [vmem:[%s1 + $0x30] sm:$0xff]
        %v181 = vld [vmem:[%s1 + $0x38] sm:$0xff]
        %183 = vset.pattern.permute.xlu0 0
        %184 = vperm.xlu0 %183, %v174
        %v185 = vpop.permute.xlu0 %184
        %188 = vset.pattern.permute.xlu0 0
        %189 = vperm.xlu0 %188, %v175
        %v190 = vpop.permute.xlu0 %189
        %193 = vset.pattern.permute.xlu0 0
        %194 = vperm.xlu0 %193, %v176
        %v195 = vpop.permute.xlu0 %194
        %198 = vset.pattern.permute.xlu0 0
        %199 = vperm.xlu0 %198, %v177
        %v200 = vpop.permute.xlu0 %199
        %203 = vset.pattern.permute.xlu0 0
        %204 = vperm.xlu0 %203, %v178
        %v205 = vpop.permute.xlu0 %204
        %208 = vset.pattern.permute.xlu0 0
        %209 = vperm.xlu0 %208, %v179
        %v210 = vpop.permute.xlu0 %209
        %213 = vset.pattern.permute.xlu0 0
        %214 = vperm.xlu0 %213, %v180
        %v215 = vpop.permute.xlu0 %214
        %218 = vset.pattern.permute.xlu0 0
        %219 = vperm.xlu0 %218, %v181
        %v220 = vpop.permute.xlu0 %219
        %v223 = vlaneseq
        %v224 = vshrl.u32 %v223, 7
        %v225 = vsub.s32 0, %v224
        %v226 = vrot.slane %v173, %v225
        %v227 = vlaneseq
        %v228 = vshrl.u32 %v227, 7
        %v229 = vsub.s32 4, %v228
        %v230 = vrot.slane %v173, %v229
        %v233 = vlaneseq
        %v234 = vshrl.u32 %v233, 7
        %v235 = vsub.s32 0, %v234
        %v236 = vrot.slane %v226, %v235
        %v237 = vlaneseq
        %v238 = vshrl.u32 %v237, 7
        %v239 = vsub.s32 0, %v238
        %v240 = vrot.slane %v230, %v239
        %v241 = vmul.f32 %v185, %v236
        %v242 = vmul.f32 %v185, %v240
        %v243 = vmul.f32 %v190, %v236
        %v244 = vmul.f32 %v190, %v240
        %v245 = vmul.f32 %v195, %v236
        %v246 = vmul.f32 %v195, %v240
        %v247 = vmul.f32 %v200, %v236
        %v248 = vmul.f32 %v200, %v240
        %v249 = vmul.f32 %v205, %v236
        %v250 = vmul.f32 %v205, %v240
        %v251 = vmul.f32 %v210, %v236
        %v252 = vmul.f32 %v210, %v240
        %v253 = vmul.f32 %v215, %v236
        %v254 = vmul.f32 %v215, %v240
        %v255 = vmul.f32 %v220, %v236
        %v256 = vmul.f32 %v220, %v240
        %257 = vset.pattern.permute.xlu0 1
        %258 = vperm.xlu0 %257, %v174
        %v259 = vpop.permute.xlu0 %258
        %261 = vset.pattern.permute.xlu0 1
        %262 = vperm.xlu0 %261, %v175
        %v263 = vpop.permute.xlu0 %262
        %265 = vset.pattern.permute.xlu0 1
        %266 = vperm.xlu0 %265, %v176
        %v267 = vpop.permute.xlu0 %266
        %269 = vset.pattern.permute.xlu0 1
        %270 = vperm.xlu0 %269, %v177
        %v271 = vpop.permute.xlu0 %270
        %273 = vset.pattern.permute.xlu0 1
        %274 = vperm.xlu0 %273, %v178
        %v275 = vpop.permute.xlu0 %274
        %277 = vset.pattern.permute.xlu0 1
        %278 = vperm.xlu0 %277, %v179
        %v279 = vpop.permute.xlu0 %278
        %281 = vset.pattern.permute.xlu0 1
        %282 = vperm.xlu0 %281, %v180
        %v283 = vpop.permute.xlu0 %282
        %285 = vset.pattern.permute.xlu0 1
        %286 = vperm.xlu0 %285, %v181
        %v287 = vpop.permute.xlu0 %286
        %v289 = vlaneseq
        %v290 = vshrl.u32 %v289, 7
        %v291 = vsub.s32 1, %v290
        %v292 = vrot.slane %v173, %v291
        %v293 = vlaneseq
        %v294 = vshrl.u32 %v293, 7
        %v295 = vsub.s32 5, %v294
        %v296 = vrot.slane %v173, %v295
        %v299 = vlaneseq
        %v300 = vshrl.u32 %v299, 7
        %v301 = vsub.s32 1, %v300
        %v302 = vrot.slane %v292, %v301
        %v303 = vlaneseq
        %v304 = vshrl.u32 %v303, 7
        %v305 = vsub.s32 1, %v304
        %v306 = vrot.slane %v296, %v305
        %v307 = vmul.f32 %v259, %v302
        %v308 = vmul.f32 %v259, %v306
        %v309 = vmul.f32 %v263, %v302
        %v310 = vmul.f32 %v263, %v306
        %v311 = vmul.f32 %v267, %v302
        %v312 = vmul.f32 %v267, %v306
        %v313 = vmul.f32 %v271, %v302
        %v314 = vmul.f32 %v271, %v306
        %v315 = vmul.f32 %v275, %v302
        %v316 = vmul.f32 %v275, %v306
        %v317 = vmul.f32 %v279, %v302
        %v318 = vmul.f32 %v279, %v306
        %v319 = vmul.f32 %v283, %v302
        %v320 = vmul.f32 %v283, %v306
        %v321 = vmul.f32 %v287, %v302
        %v322 = vmul.f32 %v287, %v306
        %v323 = vadd.f32 %v241, %v307
        %v324 = vadd.f32 %v242, %v308
        %v325 = vadd.f32 %v243, %v309
        %v326 = vadd.f32 %v244, %v310
        %v327 = vadd.f32 %v245, %v311
        %v328 = vadd.f32 %v246, %v312
        %v329 = vadd.f32 %v247, %v313
        %v330 = vadd.f32 %v248, %v314
        %v331 = vadd.f32 %v249, %v315
        %v332 = vadd.f32 %v250, %v316
        %v333 = vadd.f32 %v251, %v317
        %v334 = vadd.f32 %v252, %v318
        %v335 = vadd.f32 %v253, %v319
        %v336 = vadd.f32 %v254, %v320
        %v337 = vadd.f32 %v255, %v321
        %v338 = vadd.f32 %v256, %v322
        %339 = vset.pattern.permute.xlu0 2
        %340 = vperm.xlu0 %339, %v174
        %v341 = vpop.permute.xlu0 %340
        %343 = vset.pattern.permute.xlu0 2
        %344 = vperm.xlu0 %343, %v175
        %v345 = vpop.permute.xlu0 %344
        %347 = vset.pattern.permute.xlu0 2
        %348 = vperm.xlu0 %347, %v176
        %v349 = vpop.permute.xlu0 %348
        %351 = vset.pattern.permute.xlu0 2
        %352 = vperm.xlu0 %351, %v177
        %v353 = vpop.permute.xlu0 %352
        %355 = vset.pattern.permute.xlu0 2
        %356 = vperm.xlu0 %355, %v178
        %v357 = vpop.permute.xlu0 %356
        %359 = vset.pattern.permute.xlu0 2
        %360 = vperm.xlu0 %359, %v179
        %v361 = vpop.permute.xlu0 %360
        %363 = vset.pattern.permute.xlu0 2
        %364 = vperm.xlu0 %363, %v180
        %v365 = vpop.permute.xlu0 %364
        %367 = vset.pattern.permute.xlu0 2
        %368 = vperm.xlu0 %367, %v181
        %v369 = vpop.permute.xlu0 %368
        %v371 = vlaneseq
        %v372 = vshrl.u32 %v371, 7
        %v373 = vsub.s32 2, %v372
        %v374 = vrot.slane %v173, %v373
        %v375 = vlaneseq
        %v376 = vshrl.u32 %v375, 7
        %v377 = vsub.s32 6, %v376
        %v378 = vrot.slane %v173, %v377
        %v381 = vlaneseq
        %v382 = vshrl.u32 %v381, 7
        %v383 = vsub.s32 2, %v382
        %v384 = vrot.slane %v374, %v383
        %v385 = vlaneseq
        %v386 = vshrl.u32 %v385, 7
        %v387 = vsub.s32 2, %v386
        %v388 = vrot.slane %v378, %v387
        %v389 = vmul.f32 %v341, %v384
        %v390 = vmul.f32 %v341, %v388
        %v391 = vmul.f32 %v345, %v384
        %v392 = vmul.f32 %v345, %v388
        %v393 = vmul.f32 %v349, %v384
        %v394 = vmul.f32 %v349, %v388
        %v395 = vmul.f32 %v353, %v384
        %v396 = vmul.f32 %v353, %v388
        %v397 = vmul.f32 %v357, %v384
        %v398 = vmul.f32 %v357, %v388
        %v399 = vmul.f32 %v361, %v384
        %v400 = vmul.f32 %v361, %v388
        %v401 = vmul.f32 %v365, %v384
        %v402 = vmul.f32 %v365, %v388
        %v403 = vmul.f32 %v369, %v384
        %v404 = vmul.f32 %v369, %v388
        %v405 = vadd.f32 %v323, %v389
        %v406 = vadd.f32 %v324, %v390
        %v407 = vadd.f32 %v325, %v391
        %v408 = vadd.f32 %v326, %v392
        %v409 = vadd.f32 %v327, %v393
        %v410 = vadd.f32 %v328, %v394
        %v411 = vadd.f32 %v329, %v395
        %v412 = vadd.f32 %v330, %v396
        %v413 = vadd.f32 %v331, %v397
        %v414 = vadd.f32 %v332, %v398
        %v415 = vadd.f32 %v333, %v399
        %v416 = vadd.f32 %v334, %v400
        %v417 = vadd.f32 %v335, %v401
        %v418 = vadd.f32 %v336, %v402
        %v419 = vadd.f32 %v337, %v403
        %v420 = vadd.f32 %v338, %v404
        %421 = vst [vmem:[%s161] sm:$0xff] %v405
        %422 = vst [vmem:[%s161 + $0x8] sm:$0xff] %v406
        %423 = vst [vmem:[%s161 + $0x10] sm:$0xff] %v407
        %424 = vst [vmem:[%s161 + $0x18] sm:$0xff] %v408
        %425 = vst [vmem:[%s161 + $0x20] sm:$0xff] %v409
        %426 = vst [vmem:[%s161 + $0x28] sm:$0xff] %v410
        %427 = vst [vmem:[%s161 + $0x30] sm:$0xff] %v411
        %428 = vst [vmem:[%s161 + $0x38] sm:$0xff] %v412
        %429 = vst [vmem:[%s161 + $0x40] sm:$0xff] %v413
        %430 = vst [vmem:[%s161 + $0x48] sm:$0xff] %v414
        %431 = vst [vmem:[%s161 + $0x50] sm:$0xff] %v415
        %432 = vst [vmem:[%s161 + $0x58] sm:$0xff] %v416
        %433 = vst [vmem:[%s161 + $0x60] sm:$0xff] %v417
        %434 = vst [vmem:[%s161 + $0x68] sm:$0xff] %v418
        %435 = vst [vmem:[%s161 + $0x70] sm:$0xff] %v419
        %436 = vst [vmem:[%s161 + $0x78] sm:$0xff] %v420
        %s437 = sand.u32 %s87, 1
        %s438 = scalar_lea.sflag [#allocation3], %s437
        %s439 = sand.u32 %s87, 1
        %s440 = smul.addr %s439, 128
        %s441 = scalar_lea.vmem [#allocation2], %s440
        // Predicated region
        $region29: #{tpu_custom_call.1} parent=27 // pred_check
          %p442 = pneg %p97
        $region30: #{tpu_custom_call.1} parent=27 // pred_check_branch
          %444 = sbr.rel (%p442) target = $region32
        $region31: #{tpu_custom_call.1} parent=27 // pred_region
          %s445 = smul.u32 2, %s21
          %s447 = ssub.s32 2048, 2048
          %448 = vsyncadd %s438, %s447
          %s449 = smul.addr %s20, 16
          %s450 = sadd.s32 %s445, %s449
          %s451 = smul.addr %s450, 128
          %s452 = scalar_lea.hbm %s2, %s451
          %s453 = sshll.u32 %s441, 4
          %s454 = int_to_ptr.vmem [resolvable:$true] %s453
          %459 = dma.vmem_to_hbm [thread:$0]  %s454, 2048, %s452, %s438, 256, 256, 16
        $region32: #{tpu_custom_call.1} parent=27 // pred_fallthru
          _
      $region28: #{tpu_custom_call.1} parent=5 // pred_fallthru
        _
      %p460 = scmp.le.s32.totalorder 2, %s11
      // Predicated region
      $region33: #{tpu_custom_call.1} parent=5 // pred_check
        %p461 = pneg %p460
      $region34: #{tpu_custom_call.1} parent=5 // pred_check_branch
        %463 = sbr.rel (%p461) target = $region36
      $region35: #{tpu_custom_call.1} parent=5 // pred_region
        %s464 = ssub.s32 %s11, 2
        // Predicated region
        $region37: #{tpu_custom_call.1} parent=35 // pred_check
          %p465 = pneg %p103
        $region38: #{tpu_custom_call.1} parent=35 // pred_check_branch
          %467 = sbr.rel (%p465) target = $region40
        $region39: #{tpu_custom_call.1} parent=35 // pred_region
          %s468 = sand.u32 %s88, 1
          %s469 = scalar_lea.sflag [#allocation3], %s468
          %s470 = sand.u32 %s88, 1
          %s471 = smul.addr %s470, 128
          %s472 = scalar_lea.vmem [#allocation2], %s471
          %473 = dma.done %s469, 2048
        $region40: #{tpu_custom_call.1} parent=35 // pred_fallthru
          _
      $region36: #{tpu_custom_call.1} parent=5 // pred_fallthru
        _
    $region6: #{tpu_custom_call.1} parent=1 // loop_footer
      %s15 = sadd.s32 1, %s11
    $region7: #{tpu_custom_call.1} parent=1 // loop_footer_branch
      %10 = sbr.rel target = $region3
    $region8: #{tpu_custom_call.1} parent=1 // loop_exit
      _
    %474 = vsyncpa [#allocation3], 1
    %s475 = scalar_lea.sflag [#allocation3], 1
    %476 = vsyncpa %s475, 1

</llo_original>
